<compile_context>
chip_gen: v5e
topology: v5e:2x2
jax: 0.10.0
libtpu: 0.0.40
codegen_flags: <defaults>
</compile_context>

<pallas_src>
import functools

import jax
import jax.numpy as jnp
from jax.experimental import pallas as pl
from jax.experimental.pallas import tpu as pltpu


# ----------------------------------------------------------------------------
# Kernel
# ----------------------------------------------------------------------------
def _bn_relu_conv1x1_kernel(x_ref, scale_ref, bias_ref, w_ref, o_ref, *,
                            cin, compute_dtype):
    """Fused BN(eval) + ReLU + strided 1x1 conv on one (batch, row-tile) block.

    x_ref:     (1, h_tile, 1, Wo, stride*Cin)  stride-phase-0 input rows
    scale_ref: (1, Cin)                        gamma / sqrt(var + eps)
    bias_ref:  (1, Cin)                        beta - mean * scale
    w_ref:     (Cin, Cout)                     1x1 conv weight
    o_ref:     (1, h_tile, Wo, Cout)           output tile
    """
    _, h_tile, wo, cout = o_ref.shape

    # Column-stride phase 0 lives in the first Cin lanes of the grouped axis.
    xs = x_ref[0, :, 0, :, :cin]                                # (h_tile, Wo, Cin)
    # BN + ReLU in f32 on the VPU (v5e-safe).
    a = jnp.maximum(xs * scale_ref[...] + bias_ref[...], 0.0)
    # 1x1 conv == matmul over channels; bf16 operands, f32 MXU accumulation.
    lhs = a.reshape(h_tile * wo, cin).astype(compute_dtype)
    rhs = w_ref[...].astype(compute_dtype)
    acc = jnp.dot(lhs, rhs, preferred_element_type=jnp.float32)
    o_ref[0] = acc.reshape(h_tile, wo, cout).astype(o_ref.dtype)


# ----------------------------------------------------------------------------
# Wrapper around pallas_call
# ----------------------------------------------------------------------------
def _pick_h_tile(ho, wo, cin, cout, stride, budget_bytes=12 << 20):
    """Largest divisor of `ho` whose double-buffered in+out blocks fit the budget.

    Budget is conservative for all generations (v5e 16 MiB default scoped VMEM,
    v7x 64 MiB physical); vmem_limit_bytes is still set explicitly below.
    """
    per_row = 4 * (wo * stride * cin + wo * cout)   # f32 bytes per output row
    best = 1
    for cand in range(1, ho + 1):
        if ho % cand == 0 and 2 * cand * per_row <= budget_bytes:
            best = cand
    return best


def bn_relu_conv1x1(x, scale, bias, w, stride, *, compute_dtype=jnp.bfloat16,
                    h_tile=None):
    """x: (N,H,W,Cin) f32, w: (Cin,Cout).  Returns conv1x1(relu(bn(x)), stride) in NHWC."""
    n, h, wdim, cin = x.shape
    cout = w.shape[-1]
    if h % stride or wdim % stride:
        raise ValueError("spatial dims must be divisible by stride")
    ho, wo = h // stride, wdim // stride
    g = stride * cin

    # Free (metadata-only) reshape: splits the row/column stride phases so each
    # grid step DMAs only the rows it needs and lane-slices the column phase.
    x5 = x.reshape(n, ho, stride, wo, g)

    if h_tile is None:
        h_tile = _pick_h_tile(ho, wo, cin, cout, stride)
    grid = (n, ho // h_tile)

    x_blk = 4 * h_tile * wo * g
    o_blk = 4 * h_tile * wo * cout
    vmem_limit = int(min(56 << 20, max(32 << 20, 3 * (x_blk + o_blk))))

    kernel = functools.partial(_bn_relu_conv1x1_kernel, cin=cin,
                               compute_dtype=compute_dtype)

    return pl.pallas_call(
        kernel,
        out_shape=jax.ShapeDtypeStruct((n, ho, wo, cout), jnp.float32),
        grid=grid,
        in_specs=[
            pl.BlockSpec((1, h_tile, 1, wo, g), lambda b, i: (b, i, 0, 0, 0)),
            pl.BlockSpec((1, cin), lambda b, i: (0, 0)),
            pl.BlockSpec((1, cin), lambda b, i: (0, 0)),
            pl.BlockSpec((cin, cout), lambda b, i: (0, 0)),
        ],
        out_specs=pl.BlockSpec((1, h_tile, wo, cout), lambda b, i: (b, i, 0, 0)),
        compiler_params=pltpu.CompilerParams(
            dimension_semantics=("parallel", "parallel"),
            vmem_limit_bytes=vmem_limit),
    )(x5, scale.reshape(1, cin), bias.reshape(1, cin), w)


def _fold_bn(gamma, beta, mean, var, eps=1e-5):
    scale = gamma / jnp.sqrt(var + eps)
    return scale, beta - mean * scale


@functools.partial(jax.jit, static_argnames=("stride", "compute_dtype"))
def shortcut_forward(x_nchw, params, stride, compute_dtype=jnp.bfloat16):
    """Pallas implementation of Shortcut.forward.  x_nchw: (N,Cin,H,W) -> (N,Cout,Ho,Wo)."""
    x = jnp.transpose(x_nchw, (0, 2, 3, 1)).astype(jnp.float32)   # NCHW -> NHWC
    scale, bias = _fold_bn(params["bn_g"], params["bn_b"],
                           params["bn_m"], params["bn_v"])
    w = jnp.transpose(params["w"][:, :, 0, 0], (1, 0))            # OIHW -> (Cin, Cout)
    y = bn_relu_conv1x1(x, scale, bias, w, stride, compute_dtype=compute_dtype)
    return jnp.transpose(y, (0, 3, 1, 2))                          # NHWC -> NCHW


# ----------------------------------------------------------------------------
# Pure-JAX reference (same bf16 matmul-operand cast as the kernel)
# ----------------------------------------------------------------------------
def shortcut_reference(x_nchw, params, stride, compute_dtype=jnp.bfloat16):
    x = jnp.transpose(x_nchw, (0, 2, 3, 1)).astype(jnp.float32)
    scale, bias = _fold_bn(params["bn_g"], params["bn_b"],
                           params["bn_m"], params["bn_v"])
    a = jax.nn.relu(x * scale + bias)[:, ::stride, ::stride, :]
    w = jnp.transpose(params["w"][:, :, 0, 0], (1, 0))
    y = jnp.einsum("nhwc,cd->nhwd",
                   a.astype(compute_dtype), w.astype(compute_dtype),
                   preferred_element_type=jnp.float32)
    return jnp.transpose(y, (0, 3, 1, 2))


# ----------------------------------------------------------------------------
# Main
# ----------------------------------------------------------------------------
if __name__ == "__main__":
    N, Cin, H, W = 2, 4, 16, 16
    Cout = 8

    key = jax.random.PRNGKey(0)
    ks = jax.random.split(key, 6)
    params = dict(
        bn_g=1.0 + 0.1 * jax.random.normal(ks[0], (Cin,), jnp.float32),
        bn_b=0.1 * jax.random.normal(ks[1], (Cin,), jnp.float32),
        bn_m=0.1 * jax.random.normal(ks[2], (Cin,), jnp.float32),
        bn_v=1.0 + 0.1 * jax.random.uniform(ks[3], (Cin,), jnp.float32),
        w=jax.random.normal(ks[4], (Cout, Cin, 1, 1), jnp.float32) / jnp.sqrt(Cin),
    )
    x = jax.random.normal(ks[5], (N, Cin, H, W), jnp.float32)   # NCHW input

    for stride in (2, 1):   # exercises strided and unit-stride paths
        out = jax.block_until_ready(shortcut_forward(x, params, stride))
        ref = jax.block_until_ready(shortcut_reference(x, params, stride))
        assert out.shape == ref.shape == (N, Cout, H // stride, W // stride), out.shape
        err = float(jnp.max(jnp.abs(out - ref)))
        assert err < 1e-4, err

    print("KERNEL_OK")
</pallas_src>

<mosaic_0001>
module attributes {stable_mosaic.version = 11 : i64} {
  func.func @_bn_relu_conv1x1_kernel(%arg0: i32, %arg1: i32, %arg2: memref<1x8x1x8x8xf32, #tpu.memory_space<vmem>>, %arg3: memref<1x4xf32, #tpu.memory_space<vmem>>, %arg4: memref<1x4xf32, #tpu.memory_space<vmem>>, %arg5: memref<4x8xf32, #tpu.memory_space<vmem>>, %arg6: memref<1x8x8x8xf32, #tpu.memory_space<vmem>>) attributes {dimension_semantics = [#tpu.dimension_semantics<parallel>, #tpu.dimension_semantics<parallel>], iteration_bounds = array<i64: 2, 1>, scalar_prefetch = 0 : i64, scratch_operands = 0 : i64, tpu.core_type = #tpu.core_type<tc>, window_params = [{transform_indices = @transform_0, window_bounds = array<i64: 1, 8, 1, 8, 8>}, {pipeline_mode = #tpu.pipeline_mode<synchronous>, transform_indices = @transform_1, window_bounds = array<i64: 1, 4>}, {pipeline_mode = #tpu.pipeline_mode<synchronous>, transform_indices = @transform_2, window_bounds = array<i64: 1, 4>}, {pipeline_mode = #tpu.pipeline_mode<synchronous>, transform_indices = @transform_3, window_bounds = array<i64: 4, 8>}, {transform_indices = @transform_4, window_bounds = array<i64: 1, 8, 8, 8>}]} {
    %c0 = arith.constant 0 : index
    %c0_0 = arith.constant 0 : index
    %c0_1 = arith.constant 0 : index
    %c0_2 = arith.constant 0 : index
    %c0_3 = arith.constant 0 : index
    %0 = vector.load %arg2[%c0, %c0_0, %c0_1, %c0_2, %c0_3] : memref<1x8x1x8x8xf32, #tpu.memory_space<vmem>>, vector<1x8x1x8x4xf32>
    %1 = vector.shape_cast %0 : vector<1x8x1x8x4xf32> to vector<8x8x4xf32>
    %c0_4 = arith.constant 0 : index
    %c0_5 = arith.constant 0 : index
    %2 = vector.load %arg3[%c0_4, %c0_5] : memref<1x4xf32, #tpu.memory_space<vmem>>, vector<1x4xf32>
    %3 = vector.shape_cast %2 : vector<1x4xf32> to vector<1x1x4xf32>
    %4 = vector.broadcast %3 : vector<1x1x4xf32> to vector<8x8x4xf32>
    %5 = arith.mulf %1, %4 : vector<8x8x4xf32>
    %c0_6 = arith.constant 0 : index
    %c0_7 = arith.constant 0 : index
    %6 = vector.load %arg4[%c0_6, %c0_7] : memref<1x4xf32, #tpu.memory_space<vmem>>, vector<1x4xf32>
    %7 = vector.shape_cast %6 : vector<1x4xf32> to vector<1x1x4xf32>
    %8 = vector.broadcast %7 : vector<1x1x4xf32> to vector<8x8x4xf32>
    %9 = arith.addf %5, %8 : vector<8x8x4xf32>
    %cst = arith.constant 0.000000e+00 : f32
    %10 = vector.broadcast %cst : f32 to vector<8x8x4xf32>
    %11 = arith.maximumf %9, %10 : vector<8x8x4xf32>
    %12 = vector.shape_cast %11 : vector<8x8x4xf32> to vector<64x4xf32>
    %13 = arith.truncf %12 : vector<64x4xf32> to vector<64x4xbf16>
    %c0_8 = arith.constant 0 : index
    %c0_9 = arith.constant 0 : index
    %14 = vector.load %arg5[%c0_8, %c0_9] : memref<4x8xf32, #tpu.memory_space<vmem>>, vector<4x8xf32>
    %15 = arith.truncf %14 : vector<4x8xf32> to vector<4x8xbf16>
    %cst_10 = arith.constant dense<0.000000e+00> : vector<64x8xf32>
    %16 = tpu.matmul %13, %15, %cst_10 {dimension_numbers = #tpu.dot_dimension_numbers<[1], [0], [0], [1], [0, 0, 1, 1], [], []>} : vector<64x4xbf16>, vector<4x8xbf16>, vector<64x8xf32> -> vector<64x8xf32>
    %17 = vector.shape_cast %16 : vector<64x8xf32> to vector<8x8x8xf32>
    %c0_11 = arith.constant 0 : index
    %c0_12 = arith.constant 0 : index
    %c0_13 = arith.constant 0 : index
    %c0_14 = arith.constant 0 : index
    %18 = vector.load %arg6[%c0_11, %c0_12, %c0_13, %c0_14] : memref<1x8x8x8xf32, #tpu.memory_space<vmem>>, vector<1x8x8x8xf32>
    %19 = vector.shape_cast %18 : vector<1x8x8x8xf32> to vector<8x8x8xf32>
    %20 = vector.shape_cast %17 : vector<8x8x8xf32> to vector<1x8x8x8xf32>
    tpu.vector_store %arg6[%c0_11, %c0_12, %c0_13, %c0_14], %20 {strides = array<i32>} : memref<1x8x8x8xf32, #tpu.memory_space<vmem>>, vector<1x8x8x8xf32>,
    return
  }
  func.func @transform_0(%arg0: i32, %arg1: i32) -> (i32, i32, i32, i32, i32) {
    %c0_i32 = arith.constant 0 : i32
    %c0_i32_0 = arith.constant 0 : i32
    %c0_i32_1 = arith.constant 0 : i32
    %c0_i32_2 = arith.constant 0 : i32
    return %arg0, %arg1, %c0_i32, %c0_i32_0, %c0_i32_1 : i32, i32, i32, i32, i32
  }
  func.func @transform_1(%arg0: i32, %arg1: i32) -> (i32, i32) {
    %c0_i32 = arith.constant 0 : i32
    %c0_i32_0 = arith.constant 0 : i32
    %c0_i32_1 = arith.constant 0 : i32
    return %c0_i32, %c0_i32_0 : i32, i32
  }
  func.func @transform_2(%arg0: i32, %arg1: i32) -> (i32, i32) {
    %c0_i32 = arith.constant 0 : i32
    %c0_i32_0 = arith.constant 0 : i32
    %c0_i32_1 = arith.constant 0 : i32
    return %c0_i32, %c0_i32_0 : i32, i32
  }
  func.func @transform_3(%arg0: i32, %arg1: i32) -> (i32, i32) {
    %c0_i32 = arith.constant 0 : i32
    %c0_i32_0 = arith.constant 0 : i32
    %c0_i32_1 = arith.constant 0 : i32
    return %c0_i32, %c0_i32_0 : i32, i32
  }
  func.func @transform_4(%arg0: i32, %arg1: i32) -> (i32, i32, i32, i32) {
    %c0_i32 = arith.constant 0 : i32
    %c0_i32_0 = arith.constant 0 : i32
    %c0_i32_1 = arith.constant 0 : i32
    return %arg0, %arg1, %c0_i32, %c0_i32_0 : i32, i32, i32, i32
  }
}

</mosaic_0001>

<llo_original>
// kernel: shortcut_forward.1
$region0: #{shortcut_forward.1}
  #allocation0 [shape = 'u32[]', space=smem, size = 0x4, offset = 0x4, fixed_abs, tag = 'smem constant byte address 0x4 - core index']
  #allocation1 [shape = 'u32[72,128]{1,0:T(1,128)}', space=vmem, size = 0x9000, scoped, tag = 'internal scratch']
  %s0 = inlined_call_operand.vmem [shape: f32[2,8,2,8,8], index: 0, kind: input, shape index: {}]
  %s1 = inlined_call_operand.vmem [shape: f32[1,4], index: 1, kind: input, shape index: {}]
  %s2 = inlined_call_operand.vmem [shape: f32[1,4], index: 2, kind: input, shape index: {}]
  %s3 = inlined_call_operand.vmem [shape: f32[4,8], index: 3, kind: input, shape index: {}]
  %s4 = inlined_call_operand.vmem [shape: f32[2,8,8,8], index: 4, kind: output, shape index: {}]
  %s5 = sld [smem:[#allocation0]]
  $region87: #{shortcut_forward.1} parent=0
    _
  %s7 = ssub.s32 1, %s5
  %s8 = scalar_select 0, %s7, %s5
  $region1: #{shortcut_forward.1} parent=0
    #allocation2 [shape = 'u8[65536]{0}', space=vmem, size = 0x10000, scoped, tag = 'input window, operand 0']
    loop: start=0, step=1, limit=4
    $region2: #{shortcut_forward.1} parent=1 // loop_pre_header
      _
    $region3: #{shortcut_forward.1} parent=1 // loop_header
      %s10 = sphi 0, %s14
      %p11 = scmp.ge.s32.totalorder %s10, 4
      %s17 = sphi 0, %s29
      %s18 = sphi 0, %s25
      %s19 = sphi 0, %s17
      %s20 = sphi 0, %s18
      %s21 = sphi 0, %s19
      %s22 = sphi 0, %s20
      %s34 = sphi 0, %s36
      %s37 = sphi 0, %s34
      %s38 = sphi 0, %s37
      %s54 = sphi 0, %s38
      %s58 = sphi 0, %s58
      %s60 = sphi 0, %s58
      %s61 = sphi 0, %s60
      %s75 = sphi 0, %s61
      %s79 = sphi 0, %s79
      %s81 = sphi 0, %s79
      %s82 = sphi 0, %s81
      %s96 = sphi 0, %s82
      %s100 = sphi 0, %s100
      %s102 = sphi 0, %s100
      %s103 = sphi 0, %s102
      %s117 = sphi 0, %s103
      %s125 = sphi 0, %s127
      %s128 = sphi 0, %s125
      %s129 = sphi 0, %s128
      %s145 = sphi 0, %s129
    $region4: #{shortcut_forward.1} parent=1 // loop_header_branch
      %13 = sbr.rel (%p11) target = $region8
    $region5: #{shortcut_forward.1} parent=1 // loop_body
      %s15 = ssub.s32 %s10, 1
      %s16 = ssub.s32 %s10, 2
      %s23 = sadd.s32 1, %s18
      %p24 = scmp.ge.s32.totalorder %s23, 1
      %s25 = scalar_select %p24, 0, %s23
      %s26 = sadd.s32 1, %s17
      %s27 = scalar_select %p24, %s26, %s17
      %p28 = scmp.ge.s32.totalorder %s27, 2
      %s29 = scalar_select %p28, 0, %s27
      %s30 = ssub.s32 %s17, %s29
      %s31 = ssub.s32 %s18, %s25
      %s32 = sor.u32 %s30, %s31
      %p33 = scmp.eq.s32.totalorder %s32, 0
      %s35 = sadd.s32 %s34, 1
      %s36 = scalar_select %p33, %s34, %s35
      %p39 = pneg %p33
      %p40 = scmp.eq.s32.totalorder %s10, 1
      %p41 = por %p39, %p40
      %p42 = scmp.ne.s32.totalorder %s34, %s37
      %p43 = scmp.eq.s32.totalorder %s10, 0
      %p44 = por %p42, %p43
      %p45 = scmp.ne.s32.totalorder %s34, %s37
      %p46 = scmp.eq.s32.totalorder %s15, 1
      %p47 = por %p45, %p46
      %p48 = scmp.ne.s32.totalorder %s37, %s38
      %p49 = scmp.eq.s32.totalorder %s15, 0
      %p50 = por %p48, %p49
      %p51 = scmp.ne.s32.totalorder %s37, %s38
      %p52 = scmp.eq.s32.totalorder %s16, 1
      %p53 = por %p51, %p52
      %p55 = scmp.ne.s32.totalorder %s38, %s54
      %p56 = scmp.eq.s32.totalorder %s16, 0
      %p57 = por %p55, %p56
      %s59 = sadd.s32 %s58, 1
      %p62 = scmp.eq.s32.totalorder %s10, 1
      %p63 = scmp.ne.s32.totalorder %s58, %s60
      %p64 = scmp.eq.s32.totalorder %s10, 0
      %p65 = por %p63, %p64
      %p66 = scmp.ne.s32.totalorder %s58, %s60
      %p67 = scmp.eq.s32.totalorder %s15, 1
      %p68 = por %p66, %p67
      %p69 = scmp.ne.s32.totalorder %s60, %s61
      %p70 = scmp.eq.s32.totalorder %s15, 0
      %p71 = por %p69, %p70
      %p72 = scmp.ne.s32.totalorder %s60, %s61
      %p73 = scmp.eq.s32.totalorder %s16, 1
      %p74 = por %p72, %p73
      %p76 = scmp.ne.s32.totalorder %s61, %s75
      %p77 = scmp.eq.s32.totalorder %s16, 0
      %p78 = por %p76, %p77
      %s80 = sadd.s32 %s79, 1
      %p83 = scmp.eq.s32.totalorder %s10, 1
      %p84 = scmp.ne.s32.totalorder %s79, %s81
      %p85 = scmp.eq.s32.totalorder %s10, 0
      %p86 = por %p84, %p85
      %p87 = scmp.ne.s32.totalorder %s79, %s81
      %p88 = scmp.eq.s32.totalorder %s15, 1
      %p89 = por %p87, %p88
      %p90 = scmp.ne.s32.totalorder %s81, %s82
      %p91 = scmp.eq.s32.totalorder %s15, 0
      %p92 = por %p90, %p91
      %p93 = scmp.ne.s32.totalorder %s81, %s82
      %p94 = scmp.eq.s32.totalorder %s16, 1
      %p95 = por %p93, %p94
      %p97 = scmp.ne.s32.totalorder %s82, %s96
      %p98 = scmp.eq.s32.totalorder %s16, 0
      %p99 = por %p97, %p98
      %s101 = sadd.s32 %s100, 1
      %p104 = scmp.eq.s32.totalorder %s10, 1
      %p105 = scmp.ne.s32.totalorder %s100, %s102
      %p106 = scmp.eq.s32.totalorder %s10, 0
      %p107 = por %p105, %p106
      %p108 = scmp.ne.s32.totalorder %s100, %s102
      %p109 = scmp.eq.s32.totalorder %s15, 1
      %p110 = por %p108, %p109
      %p111 = scmp.ne.s32.totalorder %s102, %s103
      %p112 = scmp.eq.s32.totalorder %s15, 0
      %p113 = por %p111, %p112
      %p114 = scmp.ne.s32.totalorder %s102, %s103
      %p115 = scmp.eq.s32.totalorder %s16, 1
      %p116 = por %p114, %p115
      %p118 = scmp.ne.s32.totalorder %s103, %s117
      %p119 = scmp.eq.s32.totalorder %s16, 0
      %p120 = por %p118, %p119
      %s121 = ssub.s32 %s17, %s29
      %s122 = ssub.s32 %s18, %s25
      %s123 = sor.u32 %s121, %s122
      %p124 = scmp.eq.s32.totalorder %s123, 0
      %s126 = sadd.s32 %s125, 1
      %s127 = scalar_select %p124, %s125, %s126
      %p130 = pneg %p124
      %p131 = scmp.eq.s32.totalorder %s10, 1
      %p132 = por %p130, %p131
      %p133 = scmp.ne.s32.totalorder %s125, %s128
      %p134 = scmp.eq.s32.totalorder %s10, 0
      %p135 = por %p133, %p134
      %p136 = scmp.ne.s32.totalorder %s125, %s128
      %p137 = scmp.eq.s32.totalorder %s15, 1
      %p138 = por %p136, %p137
      %p139 = scmp.ne.s32.totalorder %s128, %s129
      %p140 = scmp.eq.s32.totalorder %s15, 0
      %p141 = por %p139, %p140
      %p142 = scmp.ne.s32.totalorder %s128, %s129
      %p143 = scmp.eq.s32.totalorder %s16, 1
      %p144 = por %p142, %p143
      %p146 = scmp.ne.s32.totalorder %s129, %s145
      %p147 = scmp.eq.s32.totalorder %s16, 0
      %p148 = por %p146, %p147
      %p149 = scmp.le.s32.totalorder 1, %s10
      %p150 = scmp.lt.s32.totalorder %s10, 3
      %p151 = pnand %p149, %p150
      %p152 = pneg %p151
      // Predicated region
      $region9: #{shortcut_forward.1} parent=5 // pred_check
        _
      $region10: #{shortcut_forward.1} parent=5 // pred_check_branch
        %154 = sbr.rel (%p151) target = $region12
      $region11: #{shortcut_forward.1} parent=5 // pred_region
        %s155 = ssub.s32 %s10, 1
        // Predicated region
        $region13: #{shortcut_forward.1} parent=11 // pred_check
          %p156 = pneg %p71
        $region14: #{shortcut_forward.1} parent=11 // pred_check_branch
          %158 = sbr.rel (%p156) target = $region16
        $region15: #{shortcut_forward.1} parent=11 // pred_region
          _
        $region16: #{shortcut_forward.1} parent=11 // pred_fallthru
          _
        // Predicated region
        $region17: #{shortcut_forward.1} parent=11 // pred_check
          %p159 = pneg %p92
        $region18: #{shortcut_forward.1} parent=11 // pred_check_branch
          %161 = sbr.rel (%p159) target = $region20
        $region19: #{shortcut_forward.1} parent=11 // pred_region
          _
        $region20: #{shortcut_forward.1} parent=11 // pred_fallthru
          _
        // Predicated region
        $region21: #{shortcut_forward.1} parent=11 // pred_check
          %p162 = pneg %p113
        $region22: #{shortcut_forward.1} parent=11 // pred_check_branch
          %164 = sbr.rel (%p162) target = $region24
        $region23: #{shortcut_forward.1} parent=11 // pred_region
          _
        $region24: #{shortcut_forward.1} parent=11 // pred_fallthru
          _
      $region12: #{shortcut_forward.1} parent=5 // pred_fallthru
        _
      %p165 = scmp.lt.s32.totalorder %s10, 2
      // Predicated region
      $region25: #{shortcut_forward.1} parent=5 // pred_check
        %p166 = pneg %p165
      $region26: #{shortcut_forward.1} parent=5 // pred_check_branch
        %168 = sbr.rel (%p166) target = $region28
      $region27: #{shortcut_forward.1} parent=5 // pred_region
        // Predicated region
        $region29: #{shortcut_forward.1} parent=27 // pred_check
          %p169 = pneg %p44
        $region30: #{shortcut_forward.1} parent=27 // pred_check_branch
          %171 = sbr.rel (%p169) target = $region32
        $region31: #{shortcut_forward.1} parent=27 // pred_region
          %s172 = sand.u32 %s34, 1
          %s173 = sand.u32 %s34, 1
          %s174 = smul.addr %s173, 64
          %s175 = scalar_lea.vmem [#allocation2], %s174
          %s176 = smul.u32 8, %s18
          %s177 = smul.addr %s176, 2
          %s178 = smul.addr %s17, 16
          %s179 = sadd.s32 %s177, %s178
          %s180 = smul.addr %s179, 8
          %s181 = scalar_lea.vmem %s0, %s180
          // Predicated region
          $region33: #{shortcut_forward.1} parent=31 // pred_check
            _
          $region34: #{shortcut_forward.1} parent=31 // pred_check_branch
            %183 = sbr.rel (0) target = $region36
          $region35: #{shortcut_forward.1} parent=31 // pred_region
            // Predicated region
            $region37: #{shortcut_forward.1} parent=35 // pred_check
              _
            $region38: #{shortcut_forward.1} parent=35 // pred_check_branch
              %185 = sbr.rel (0) target = $region40
            $region39: #{shortcut_forward.1} parent=35 // pred_region
              // Predicated region
              $region52: #{shortcut_forward.1} parent=39 // pred_check
                _
              $region53: #{shortcut_forward.1} parent=39 // pred_check_branch
                %215 = sbr.rel (0) target = $region55
              $region54: #{shortcut_forward.1} parent=39 // pred_region
                loop: start=0, step=1, limit=1
                $region56: #{shortcut_forward.1} parent=54 // loop_pre_header
                  _
                $region57: #{shortcut_forward.1} parent=54 // loop_header
                  %s217 = sphi 0, %s221
                  %p218 = scmp.ge.s32.totalorder %s217, 1
                  %s222 = sphi %s181, %s181
                  %s223 = sphi %s175, %s175
                $region58: #{shortcut_forward.1} parent=54 // loop_header_branch
                  %220 = sbr.rel (%p218) target = $region62
                $region59: #{shortcut_forward.1} parent=54 // loop_body
                  %v224 = vld [vmem:[%s222] sm:$0xff]
                  %225 = vst [vmem:[%s223] sm:$0xff] %v224
                  %v226 = vld [vmem:[%s222 + $0x10] sm:$0xff]
                  %227 = vst [vmem:[%s223 + $0x8] sm:$0xff] %v226
                  %v228 = vld [vmem:[%s222 + $0x20] sm:$0xff]
                  %229 = vst [vmem:[%s223 + $0x10] sm:$0xff] %v228
                  %v230 = vld [vmem:[%s222 + $0x30] sm:$0xff]
                  %231 = vst [vmem:[%s223 + $0x18] sm:$0xff] %v230
                  %v232 = vld [vmem:[%s222 + $0x40] sm:$0xff]
                  %233 = vst [vmem:[%s223 + $0x20] sm:$0xff] %v232
                  %v234 = vld [vmem:[%s222 + $0x50] sm:$0xff]
                  %235 = vst [vmem:[%s223 + $0x28] sm:$0xff] %v234
                  %v236 = vld [vmem:[%s222 + $0x60] sm:$0xff]
                  %237 = vst [vmem:[%s223 + $0x30] sm:$0xff] %v236
                  %v238 = vld [vmem:[%s222 + $0x70] sm:$0xff]
                  %239 = vst [vmem:[%s223 + $0x38] sm:$0xff] %v238
                $region60: #{shortcut_forward.1} parent=54 // loop_footer
                  %s221 = sadd.s32 1, %s217
                $region61: #{shortcut_forward.1} parent=54 // loop_footer_branch
                  %216 = sbr.rel target = $region57
                $region62: #{shortcut_forward.1} parent=54 // loop_exit
                  _
              $region55: #{shortcut_forward.1} parent=39 // pred_fallthru
                _
              // Predicated region
              $region63: #{shortcut_forward.1} parent=39 // pred_check
                _
              $region64: #{shortcut_forward.1} parent=39 // pred_check_branch
                %241 = sbr.rel target = $region66
              $region65: #{shortcut_forward.1} parent=39 // pred_region
                _
              $region66: #{shortcut_forward.1} parent=39 // pred_fallthru
                _
            $region40: #{shortcut_forward.1} parent=35 // pred_fallthru
              _
            // Predicated region
            $region41: #{shortcut_forward.1} parent=35 // pred_check
              _
            $region42: #{shortcut_forward.1} parent=35 // pred_check_branch
              %187 = sbr.rel target = $region44
            $region43: #{shortcut_forward.1} parent=35 // pred_region
              %s189 = ssub.s32 256, 1
              loop: start=0, step=1, limit=1
              $region45: #{shortcut_forward.1} parent=43 // loop_pre_header
                _
              $region46: #{shortcut_forward.1} parent=43 // loop_header
                %s191 = sphi 0, %s195
                %p192 = scmp.ge.s32.totalorder %s191, 1
                %s196 = sphi %s181, %s181
                %s197 = sphi %s175, %s175
              $region47: #{shortcut_forward.1} parent=43 // loop_header_branch
                %194 = sbr.rel (%p192) target = $region51
              $region48: #{shortcut_forward.1} parent=43 // loop_body
                %v198 = vld [vmem:[%s196] sm:%s189]
                %199 = vst [vmem:[%s197] sm:%s189] %v198
                %v200 = vld [vmem:[%s196 + $0x10] sm:%s189]
                %201 = vst [vmem:[%s197 + $0x8] sm:%s189] %v200
                %v202 = vld [vmem:[%s196 + $0x20] sm:%s189]
                %203 = vst [vmem:[%s197 + $0x10] sm:%s189] %v202
                %v204 = vld [vmem:[%s196 + $0x30] sm:%s189]
                %205 = vst [vmem:[%s197 + $0x18] sm:%s189] %v204
                %v206 = vld [vmem:[%s196 + $0x40] sm:%s189]
                %207 = vst [vmem:[%s197 + $0x20] sm:%s189] %v206
                %v208 = vld [vmem:[%s196 + $0x50] sm:%s189]
                %209 = vst [vmem:[%s197 + $0x28] sm:%s189] %v208
                %v210 = vld [vmem:[%s196 + $0x60] sm:%s189]
                %211 = vst [vmem:[%s197 + $0x30] sm:%s189] %v210
                %v212 = vld [vmem:[%s196 + $0x70] sm:%s189]
                %213 = vst [vmem:[%s197 + $0x38] sm:%s189] %v212
              $region49: #{shortcut_forward.1} parent=43 // loop_footer
                %s195 = sadd.s32 1, %s191
              $region50: #{shortcut_forward.1} parent=43 // loop_footer_branch
                %190 = sbr.rel target = $region46
              $region51: #{shortcut_forward.1} parent=43 // loop_exit
                _
            $region44: #{shortcut_forward.1} parent=35 // pred_fallthru
              _
          $region36: #{shortcut_forward.1} parent=31 // pred_fallthru
            _
          %242 = vnop
        $region32: #{shortcut_forward.1} parent=27 // pred_fallthru
          _
      $region28: #{shortcut_forward.1} parent=5 // pred_fallthru
        _
      %p243 = scmp.le.s32.totalorder 1, %s10
      %p244 = scmp.lt.s32.totalorder %s10, 3
      %p245 = pnand %p243, %p244
      %p246 = pneg %p245
      // Predicated region
      $region67: #{shortcut_forward.1} parent=5 // pred_check
        _
      $region68: #{shortcut_forward.1} parent=5 // pred_check_branch
        %248 = sbr.rel (%p245) target = $region70
      $region69: #{shortcut_forward.1} parent=5 // pred_region
        %s249 = ssub.s32 %s10, 1
        %s250 = sand.u32 %s37, 1
        %s251 = sand.u32 %s37, 1
        %s252 = smul.addr %s251, 64
        %s253 = scalar_lea.vmem [#allocation2], %s252
        // Predicated region
        $region71: #{shortcut_forward.1} parent=69 // pred_check
          %p254 = pneg %p50
        $region72: #{shortcut_forward.1} parent=69 // pred_check_branch
          %256 = sbr.rel (%p254) target = $region74
        $region73: #{shortcut_forward.1} parent=69 // pred_region
          _
        $region74: #{shortcut_forward.1} parent=69 // pred_fallthru
          _
        %s257 = sand.u32 %s37, 1
        %s258 = sand.u32 %s37, 1
        %s259 = smul.addr %s258, 64
        %s260 = scalar_lea.vmem [#allocation2], %s259
        %p261 = pneg %p50
        %p262 = pneg %p47
        %p263 = pneg %p71
        %p264 = pneg %p68
        %p265 = pneg %p92
        %p266 = pneg %p89
        %p267 = pneg %p113
        %p268 = pneg %p110
        %p269 = pneg %p141
        %p270 = pneg %p138
        %s271 = smul.u32 8, %s20
        %p272 = scmp.lt.s32.totalorder %s19, 1
        %s273 = scalar_select %p272, %s19, 1
        %p274 = scmp.lt.s32.totalorder %s271, 7
        %s275 = scalar_select %p274, %s271, 7
        %s276 = smul.addr %s273, 8
        %s277 = sadd.s32 %s275, %s276
        %s278 = smul.addr %s277, 8
        %s279 = scalar_lea.vmem %s4, %s278
        %s280 = smul.u32 8, %s20
        %s281 = smul.u32 8, %s20
        %p282 = scmp.lt.s32.totalorder %s19, 1
        %s283 = scalar_select %p282, %s19, 1
        %p284 = scmp.lt.s32.totalorder %s281, 7
        %s285 = scalar_select %p284, %s281, 7
        %s286 = smul.addr %s283, 8
        %s287 = sadd.s32 %s285, %s286
        %s288 = smul.addr %s287, 8
        %s289 = scalar_lea.vmem %s4, %s288
        %s290 = smul.u32 8, %s20
        %v292 = vld [vmem:[%s253] sm:$0xff]
        %v293 = vld [vmem:[%s253 + $0x8] sm:$0xff]
        %v294 = vld [vmem:[%s253 + $0x10] sm:$0xff]
        %v295 = vld [vmem:[%s253 + $0x18] sm:$0xff]
        %v296 = vld [vmem:[%s253 + $0x20] sm:$0xff]
        %v297 = vld [vmem:[%s253 + $0x28] sm:$0xff]
        %v298 = vld [vmem:[%s253 + $0x30] sm:$0xff]
        %v299 = vld [vmem:[%s253 + $0x38] sm:$0xff]
        %v300 = vld [vmem:[%s1] sm:$0x1]
        %v302 = vperm.slane %v300, 0
        %v304 = vmul.f32 %v292, %v302
        %v305 = vmul.f32 %v293, %v302
        %v306 = vmul.f32 %v294, %v302
        %v307 = vmul.f32 %v295, %v302
        %v308 = vmul.f32 %v296, %v302
        %v309 = vmul.f32 %v297, %v302
        %v310 = vmul.f32 %v298, %v302
        %v311 = vmul.f32 %v299, %v302
        %v312 = vld [vmem:[%s2] sm:$0x1]
        %v314 = vperm.slane %v312, 0
        %v316 = vadd.f32 %v304, %v314
        %v317 = vadd.f32 %v305, %v314
        %v318 = vadd.f32 %v306, %v314
        %v319 = vadd.f32 %v307, %v314
        %v320 = vadd.f32 %v308, %v314
        %v321 = vadd.f32 %v309, %v314
        %v322 = vadd.f32 %v310, %v314
        %v323 = vadd.f32 %v311, %v314
        %v324 = vmax.f32 %v316, 0.0
        %v325 = vmax.f32 %v317, 0.0
        %v326 = vmax.f32 %v318, 0.0
        %v327 = vmax.f32 %v319, 0.0
        %v328 = vmax.f32 %v320, 0.0
        %v329 = vmax.f32 %v321, 0.0
        %v330 = vmax.f32 %v322, 0.0
        %v331 = vmax.f32 %v323, 0.0
        %v332 = vpack.c.bf16 %v325, %v324
        %v333 = vpack.c.bf16 %v327, %v326
        %v334 = vpack.c.bf16 %v329, %v328
        %v335 = vpack.c.bf16 %v331, %v330
        %v336 = vld [vmem:[%s3] sm:$0xf]
        %v337 = vpack.c.bf16 %v336, %v336
        %vm338 = vcmask 31744
        %v340 = vsel %vm338, %v332, 0
        %v343 = vsel %vm338, %v333, 0
        %v346 = vsel %vm338, %v334, 0
        %v349 = vsel %vm338, %v335, 0
        %vm351 = vcmask 1041408
        %v353 = vsel %vm351, %v337, 0
        %355 = vmatpush.bf16.msra.mxu0 0
        %356 = vmatpush.bf16.msra.mxu0 0
        %357 = vmatpush.bf16.msra.mxu0 0
        %358 = vmatpush.bf16.msra.mxu0 0
        %359 = vmatpush.bf16.msra.mxu0 0
        %360 = vmatpush.bf16.msra.mxu0 0
        %361 = vmatpush.bf16.msra.mxu0 0
        %362 = vmatpush.bf16.msra.mxu0 %v353
        %363 = vmatmul.bf16.gmra.mxu0 %v340
        %v364 = vpop.f32.mrf.mxu0
        %v365 = vadd.f32 0.0, %v364
        %v366 = vpop.f32.mrf.mxu0
        %v367 = vadd.f32 0.0, %v366
        %368 = vmatmul.bf16.gmra.mxu0 %v343
        %v369 = vpop.f32.mrf.mxu0
        %v370 = vadd.f32 0.0, %v369
        %v371 = vpop.f32.mrf.mxu0
        %v372 = vadd.f32 0.0, %v371
        %373 = vmatmul.bf16.gmra.mxu0 %v346
        %v374 = vpop.f32.mrf.mxu0
        %v375 = vadd.f32 0.0, %v374
        %v376 = vpop.f32.mrf.mxu0
        %v377 = vadd.f32 0.0, %v376
        %378 = vmatmul.bf16.gmra.mxu0 %v349
        %v379 = vpop.f32.mrf.mxu0
        %v380 = vadd.f32 0.0, %v379
        %v381 = vpop.f32.mrf.mxu0
        %v382 = vadd.f32 0.0, %v381
        %383 = vdwg.mxu0
        %vm384 = vcmask 64512
        %385 = vst.msk [vmem:[%s289] sm:$0xff] %vm384, %v365
        %386 = vst.msk [vmem:[%s289 + $0x8] sm:$0xff] %vm384, %v367
        %387 = vst.msk [vmem:[%s289 + $0x10] sm:$0xff] %vm384, %v370
        %388 = vst.msk [vmem:[%s289 + $0x18] sm:$0xff] %vm384, %v372
        %389 = vst.msk [vmem:[%s289 + $0x20] sm:$0xff] %vm384, %v375
        %390 = vst.msk [vmem:[%s289 + $0x28] sm:$0xff] %vm384, %v377
        %391 = vst.msk [vmem:[%s289 + $0x30] sm:$0xff] %vm384, %v380
        %392 = vst.msk [vmem:[%s289 + $0x38] sm:$0xff] %vm384, %v382
        %s393 = smul.u32 8, %s20
        %p394 = scmp.lt.s32.totalorder %s19, 1
        %s395 = scalar_select %p394, %s19, 1
        %p396 = scmp.lt.s32.totalorder %s393, 7
        %s397 = scalar_select %p396, %s393, 7
        %s398 = smul.addr %s395, 8
        %s399 = sadd.s32 %s397, %s398
        %s400 = smul.addr %s399, 8
        %s401 = scalar_lea.vmem %s4, %s400
        // Predicated region
        $region75: #{shortcut_forward.1} parent=69 // pred_check
          %p402 = pneg %p138
        $region76: #{shortcut_forward.1} parent=69 // pred_check_branch
          %404 = sbr.rel (%p402) target = $region78
        $region77: #{shortcut_forward.1} parent=69 // pred_region
          %s405 = smul.u32 8, %s20
        $region78: #{shortcut_forward.1} parent=69 // pred_fallthru
          _
      $region70: #{shortcut_forward.1} parent=5 // pred_fallthru
        _
      %p406 = scmp.le.s32.totalorder 2, %s10
      // Predicated region
      $region79: #{shortcut_forward.1} parent=5 // pred_check
        %p407 = pneg %p406
      $region80: #{shortcut_forward.1} parent=5 // pred_check_branch
        %409 = sbr.rel (%p407) target = $region82
      $region81: #{shortcut_forward.1} parent=5 // pred_region
        %s410 = ssub.s32 %s10, 2
        // Predicated region
        $region83: #{shortcut_forward.1} parent=81 // pred_check
          %p411 = pneg %p144
        $region84: #{shortcut_forward.1} parent=81 // pred_check_branch
          %413 = sbr.rel (%p411) target = $region86
        $region85: #{shortcut_forward.1} parent=81 // pred_region
          %s414 = smul.u32 8, %s22
          %p415 = scmp.lt.s32.totalorder %s21, 1
          %s416 = scalar_select %p415, %s21, 1
          %p417 = scmp.lt.s32.totalorder %s414, 7
          %s418 = scalar_select %p417, %s414, 7
          %s419 = smul.addr %s416, 8
          %s420 = sadd.s32 %s418, %s419
          %s421 = smul.addr %s420, 8
          %s422 = scalar_lea.vmem %s4, %s421
        $region86: #{shortcut_forward.1} parent=81 // pred_fallthru
          _
      $region82: #{shortcut_forward.1} parent=5 // pred_fallthru
        _
    $region6: #{shortcut_forward.1} parent=1 // loop_footer
      %s14 = sadd.s32 1, %s10
    $region7: #{shortcut_forward.1} parent=1 // loop_footer_branch
      %9 = sbr.rel target = $region3
    $region8: #{shortcut_forward.1} parent=1 // loop_exit
      _

</llo_original>
